<compile_context>
chip_gen: v6e
topology: v6e:2x2x1
jax: 0.10.0
libtpu: 0.0.40
codegen_flags: <defaults>
</compile_context>

<pallas_src>
import jax
import jax.numpy as jnp
from jax.experimental import pallas as pl
from jax.experimental.pallas import tpu as pltpu

EPS = 1e-5


def _resblock_kernel(x_ref, w1r_ref, b1_ref, w2_ref, b2_ref,
                     g1_ref, be1_ref, g2_ref, be2_ref, gr_ref, ber_ref,
                     o_ref):
    N, Cin, L = x_ref.shape
    Cout = o_ref.shape[1]
    inv_cnt = 1.0 / float(N * L)          # static

    x = x_ref[...]                        # (N, Cin, L) bf16
    w1r = w1r_ref[...]                    # (2*Cout, Cin) bf16

    def bmm(w, a):
        # (Co, Ci) @ (N, Ci, L) -> (N, Co, L); bf16 operands, f32 MXU accumulate.
        wb = jnp.broadcast_to(w, (N,) + w.shape)
        return jax.lax.dot_general(
            wb, a, (((2,), (1,)), ((0,), (0,))),
            preferred_element_type=jnp.float32)

    def bn(h, gamma, beta):
        # BatchNorm2d training-mode batch statistics (biased variance), as in
        # PyTorch's default model(x).  One pass: sum & sum-of-squares over the
        # (batch, spatial) axes; all statistics math in f32.
        s = jnp.sum(jnp.sum(h, axis=2, keepdims=True), axis=0, keepdims=True)
        ss = jnp.sum(jnp.sum(h * h, axis=2, keepdims=True), axis=0,
                     keepdims=True)
        mean = s * inv_cnt
        var = jnp.maximum(ss * inv_cnt - mean * mean, 0.0)
        scale = jax.lax.rsqrt(var + EPS) * gamma         # (1, Cout, 1)
        return (h - mean) * scale + beta

    # Fused conv1 + residual-branch 1x1 convs (single pass over x on the MXU).
    t = bmm(w1r, x)                       # (N, 2*Cout, L) f32
    t1 = t[:, :Cout, :] + b1_ref[...]     # conv1 has bias
    tr = t[:, Cout:, :]                   # residual conv: bias=False

    # main branch
    h = bn(t1, g1_ref[...], be1_ref[...])
    h = jnp.maximum(h, 0.0)                                  # ReLU
    h = bmm(w2_ref[...], h.astype(jnp.bfloat16)) + b2_ref[...]
    h = bn(h, g2_ref[...], be2_ref[...])

    # residual branch
    r = bn(tr, gr_ref[...], ber_ref[...])

    o_ref[...] = jnp.maximum(h + r, 0.0)                     # add + ReLU


def residual_block_pallas(x_nchw, params, stride):
    (w1, b1, w2, b2, wr, g1, be1, g2, be2, gr, ber) = params
    N, Cin, H, W = x_nchw.shape
    Cout = w1.shape[0]

    # k=1 strided conv == stride-slice the input, then 1x1 conv.
    xs = x_nchw[:, :, ::stride, ::stride]
    _, _, Ho, Wo = xs.shape
    L = Ho * Wo

    # Channels-first, spatial-in-lanes layout.  (N, Cin, Ho*Wo) is a plain
    # reshape of the (strided) NCHW input — no transpose — and the kernel's
    # (N, Cout, Ho*Wo) output reshapes back to NCHW for free.
    x3 = xs.reshape(N, Cin, L).astype(jnp.bfloat16)

    # Fuse conv1 + residual conv weights; feed the MXU bf16.
    w1r = jnp.concatenate([w1, wr], axis=0).astype(jnp.bfloat16)  # (2*Cout, Cin)
    w2b = w2.astype(jnp.bfloat16)

    col = lambda v: v.reshape(Cout, 1).astype(jnp.float32)
    args = (x3, w1r, col(b1), w2b, col(b2),
            col(g1), col(be1), col(g2), col(be2), col(gr), col(ber))

    def full_spec(shape):
        nd = len(shape)
        return pl.BlockSpec(shape, lambda i, _nd=nd: (0,) * _nd)

    out3 = pl.pallas_call(
        _resblock_kernel,
        out_shape=jax.ShapeDtypeStruct((N, Cout, L), jnp.float32),
        grid=(1,),
        in_specs=[full_spec(a.shape) for a in args],
        out_specs=full_spec((N, Cout, L)),
        compiler_params=pltpu.CompilerParams(
            dimension_semantics=("arbitrary",),
            vmem_limit_bytes=32 * 1024 * 1024),
    )(*args)

    return out3.reshape(N, Cout, Ho, Wo)


def residual_block_ref(x_nchw, params, stride):
    """Pure-JAX f32 reference with the module's forward semantics."""
    (w1, b1, w2, b2, wr, g1, be1, g2, be2, gr, ber) = params
    xs = x_nchw[:, :, ::stride, ::stride]
    N, Cin, Ho, Wo = xs.shape
    Cout = w1.shape[0]
    x2 = xs.reshape(N, Cin, Ho * Wo)

    def conv1x1(w, a, b=None):
        y = jnp.einsum('oc,ncl->nol', w, a)
        if b is not None:
            y = y + b[None, :, None]
        return y

    def bn(h, g, b):
        m = jnp.mean(h, axis=(0, 2), keepdims=True)
        v = jnp.mean((h - m) ** 2, axis=(0, 2), keepdims=True)
        return (h - m) / jnp.sqrt(v + EPS) * g[None, :, None] + b[None, :, None]

    h = bn(conv1x1(w1, x2, b1), g1, be1)
    h = jnp.maximum(h, 0.0)
    h = bn(conv1x1(w2, h, b2), g2, be2)
    r = bn(conv1x1(wr, x2), gr, ber)
    o = jnp.maximum(h + r, 0.0)
    return o.reshape(N, Cout, Ho, Wo)


def make_params(key, in_channels, out_channels):
    ks = jax.random.split(key, 11)
    # PyTorch-layout 1x1 conv weights: (Cout, Cin).
    w1 = jax.random.normal(ks[0], (out_channels, in_channels), jnp.float32) * 0.2
    b1 = jax.random.normal(ks[1], (out_channels,), jnp.float32) * 0.1
    w2 = jax.random.normal(ks[2], (out_channels, out_channels), jnp.float32) * 0.2
    b2 = jax.random.normal(ks[3], (out_channels,), jnp.float32) * 0.1
    wr = jax.random.normal(ks[4], (out_channels, in_channels), jnp.float32) * 0.2
    # BatchNorm affine params (PyTorch default is weight=1, bias=0; perturb so
    # they are exercised).
    g1 = 1.0 + 0.1 * jax.random.normal(ks[5], (out_channels,), jnp.float32)
    be1 = 0.1 * jax.random.normal(ks[6], (out_channels,), jnp.float32)
    g2 = 1.0 + 0.1 * jax.random.normal(ks[7], (out_channels,), jnp.float32)
    be2 = 0.1 * jax.random.normal(ks[8], (out_channels,), jnp.float32)
    gr = 1.0 + 0.1 * jax.random.normal(ks[9], (out_channels,), jnp.float32)
    ber = 0.1 * jax.random.normal(ks[10], (out_channels,), jnp.float32)
    return (w1, b1, w2, b2, wr, g1, be1, g2, be2, gr, ber)


if __name__ == "__main__":
    N, Cin, H, W = 2, 4, 16, 16
    Cout = 8
    kernel_size = 1   # only shape-consistent choice for this module (see note)
    stride = 2

    key = jax.random.PRNGKey(0)
    k_x, k_p = jax.random.split(key)
    x = jax.random.normal(k_x, (N, Cin, H, W), jnp.float32)
    params = make_params(k_p, Cin, Cout)

    out = residual_block_pallas(x, params, stride)
    out = jax.block_until_ready(out)

    ref = residual_block_ref(x, params, stride)
    assert out.shape == (N, Cout, H // stride, W // stride), out.shape
    # bf16 MXU feeds (with f32 accumulation / f32 BN statistics) vs the pure
    # f32 module-semantics reference -> loosened tolerance.
    assert jnp.allclose(out, ref, atol=5e-2, rtol=5e-2), (
        float(jnp.max(jnp.abs(out - ref))))

    print("KERNEL_OK")
</pallas_src>

<mosaic_0001>
module attributes {stable_mosaic.version = 11 : i64} {
  func.func @_resblock_kernel(%arg0: i32, %arg1: memref<2x4x64xbf16, #tpu.memory_space<vmem>>, %arg2: memref<16x4xbf16, #tpu.memory_space<vmem>>, %arg3: memref<8x1xf32, #tpu.memory_space<vmem>>, %arg4: memref<8x8xbf16, #tpu.memory_space<vmem>>, %arg5: memref<8x1xf32, #tpu.memory_space<vmem>>, %arg6: memref<8x1xf32, #tpu.memory_space<vmem>>, %arg7: memref<8x1xf32, #tpu.memory_space<vmem>>, %arg8: memref<8x1xf32, #tpu.memory_space<vmem>>, %arg9: memref<8x1xf32, #tpu.memory_space<vmem>>, %arg10: memref<8x1xf32, #tpu.memory_space<vmem>>, %arg11: memref<8x1xf32, #tpu.memory_space<vmem>>, %arg12: memref<2x8x64xf32, #tpu.memory_space<vmem>>) attributes {dimension_semantics = [#tpu.dimension_semantics<arbitrary>], iteration_bounds = array<i64: 1>, scalar_prefetch = 0 : i64, scratch_operands = 0 : i64, tpu.core_type = #tpu.core_type<tc>, window_params = [{pipeline_mode = #tpu.pipeline_mode<synchronous>, transform_indices = @transform_0, window_bounds = array<i64: 2, 4, 64>}, {pipeline_mode = #tpu.pipeline_mode<synchronous>, transform_indices = @transform_1, window_bounds = array<i64: 16, 4>}, {pipeline_mode = #tpu.pipeline_mode<synchronous>, transform_indices = @transform_2, window_bounds = array<i64: 8, 1>}, {pipeline_mode = #tpu.pipeline_mode<synchronous>, transform_indices = @transform_3, window_bounds = array<i64: 8, 8>}, {pipeline_mode = #tpu.pipeline_mode<synchronous>, transform_indices = @transform_4, window_bounds = array<i64: 8, 1>}, {pipeline_mode = #tpu.pipeline_mode<synchronous>, transform_indices = @transform_5, window_bounds = array<i64: 8, 1>}, {pipeline_mode = #tpu.pipeline_mode<synchronous>, transform_indices = @transform_6, window_bounds = array<i64: 8, 1>}, {pipeline_mode = #tpu.pipeline_mode<synchronous>, transform_indices = @transform_7, window_bounds = array<i64: 8, 1>}, {pipeline_mode = #tpu.pipeline_mode<synchronous>, transform_indices = @transform_8, window_bounds = array<i64: 8, 1>}, {pipeline_mode = #tpu.pipeline_mode<synchronous>, transform_indices = @transform_9, window_bounds = array<i64: 8, 1>}, {pipeline_mode = #tpu.pipeline_mode<synchronous>, transform_indices = @transform_10, window_bounds = array<i64: 8, 1>}, {pipeline_mode = #tpu.pipeline_mode<synchronous>, transform_indices = @transform_11, window_bounds = array<i64: 2, 8, 64>}]} {
    %c0 = arith.constant 0 : index
    %c0_0 = arith.constant 0 : index
    %c0_1 = arith.constant 0 : index
    %0 = vector.load %arg1[%c0, %c0_0, %c0_1] : memref<2x4x64xbf16, #tpu.memory_space<vmem>>, vector<2x4x64xbf16>
    %c0_2 = arith.constant 0 : index
    %c0_3 = arith.constant 0 : index
    %1 = vector.load %arg2[%c0_2, %c0_3] : memref<16x4xbf16, #tpu.memory_space<vmem>>, vector<16x4xbf16>
    %2 = vector.shape_cast %1 : vector<16x4xbf16> to vector<1x16x4xbf16>
    %3 = vector.broadcast %2 : vector<1x16x4xbf16> to vector<2x16x4xbf16>
    %cst = arith.constant dense<0.000000e+00> : vector<2x16x64xf32>
    %4 = tpu.matmul %3, %0, %cst {dimension_numbers = #tpu.dot_dimension_numbers<[2], [1], [1], [2], [0, 0, 0, 1, 1, 2], [0], [0]>} : vector<2x16x4xbf16>, vector<2x4x64xbf16>, vector<2x16x64xf32> -> vector<2x16x64xf32>
    %5 = vector.extract_strided_slice %4 {offsets = [0, 0, 0], sizes = [2, 8, 64], strides = [1, 1, 1]} : vector<2x16x64xf32> to vector<2x8x64xf32>
    %c0_4 = arith.constant 0 : index
    %c0_5 = arith.constant 0 : index
    %6 = vector.load %arg3[%c0_4, %c0_5] : memref<8x1xf32, #tpu.memory_space<vmem>>, vector<8x1xf32>
    %7 = vector.shape_cast %6 : vector<8x1xf32> to vector<1x8x1xf32>
    %8 = vector.broadcast %7 : vector<1x8x1xf32> to vector<2x8x64xf32>
    %9 = arith.addf %5, %8 : vector<2x8x64xf32>
    %10 = vector.extract_strided_slice %4 {offsets = [0, 8, 0], sizes = [2, 8, 64], strides = [1, 1, 1]} : vector<2x16x64xf32> to vector<2x8x64xf32>
    %c0_6 = arith.constant 0 : index
    %c0_7 = arith.constant 0 : index
    %11 = vector.load %arg6[%c0_6, %c0_7] : memref<8x1xf32, #tpu.memory_space<vmem>>, vector<8x1xf32>
    %c0_8 = arith.constant 0 : index
    %c0_9 = arith.constant 0 : index
    %12 = vector.load %arg7[%c0_8, %c0_9] : memref<8x1xf32, #tpu.memory_space<vmem>>, vector<8x1xf32>
    %cst_10 = arith.constant dense<0.000000e+00> : vector<2x8xf32>
    %13 = vector.multi_reduction <add>, %9, %cst_10 [2] : vector<2x8x64xf32> to vector<2x8xf32>
    %14 = vector.shape_cast %13 : vector<2x8xf32> to vector<2x8x1xf32>
    %cst_11 = arith.constant dense<0.000000e+00> : vector<8x1xf32>
    %15 = vector.multi_reduction <add>, %14, %cst_11 [0] : vector<2x8x1xf32> to vector<8x1xf32>
    %16 = vector.shape_cast %15 : vector<8x1xf32> to vector<1x8x1xf32>
    %17 = arith.mulf %9, %9 : vector<2x8x64xf32>
    %cst_12 = arith.constant dense<0.000000e+00> : vector<2x8xf32>
    %18 = vector.multi_reduction <add>, %17, %cst_12 [2] : vector<2x8x64xf32> to vector<2x8xf32>
    %19 = vector.shape_cast %18 : vector<2x8xf32> to vector<2x8x1xf32>
    %cst_13 = arith.constant dense<0.000000e+00> : vector<8x1xf32>
    %20 = vector.multi_reduction <add>, %19, %cst_13 [0] : vector<2x8x1xf32> to vector<8x1xf32>
    %21 = vector.shape_cast %20 : vector<8x1xf32> to vector<1x8x1xf32>
    %cst_14 = arith.constant 7.812500e-03 : f32
    %22 = vector.broadcast %cst_14 : f32 to vector<1x8x1xf32>
    %23 = arith.mulf %16, %22 : vector<1x8x1xf32>
    %cst_15 = arith.constant 7.812500e-03 : f32
    %24 = vector.broadcast %cst_15 : f32 to vector<1x8x1xf32>
    %25 = arith.mulf %21, %24 : vector<1x8x1xf32>
    %26 = arith.mulf %23, %23 : vector<1x8x1xf32>
    %27 = arith.subf %25, %26 : vector<1x8x1xf32>
    %cst_16 = arith.constant 0.000000e+00 : f32
    %28 = vector.broadcast %cst_16 : f32 to vector<1x8x1xf32>
    %29 = arith.maximumf %27, %28 : vector<1x8x1xf32>
    %cst_17 = arith.constant 9.99999974E-6 : f32
    %30 = vector.broadcast %cst_17 : f32 to vector<1x8x1xf32>
    %31 = arith.addf %29, %30 : vector<1x8x1xf32>
    %32 = math.rsqrt %31 : vector<1x8x1xf32>
    %33 = vector.shape_cast %11 : vector<8x1xf32> to vector<1x8x1xf32>
    %34 = arith.mulf %32, %33 : vector<1x8x1xf32>
    %35 = vector.broadcast %23 : vector<1x8x1xf32> to vector<2x8x64xf32>
    %36 = arith.subf %9, %35 : vector<2x8x64xf32>
    %37 = vector.broadcast %34 : vector<1x8x1xf32> to vector<2x8x64xf32>
    %38 = arith.mulf %36, %37 : vector<2x8x64xf32>
    %39 = vector.shape_cast %12 : vector<8x1xf32> to vector<1x8x1xf32>
    %40 = vector.broadcast %39 : vector<1x8x1xf32> to vector<2x8x64xf32>
    %41 = arith.addf %38, %40 : vector<2x8x64xf32>
    %cst_18 = arith.constant 0.000000e+00 : f32
    %42 = vector.broadcast %cst_18 : f32 to vector<2x8x64xf32>
    %43 = arith.maximumf %41, %42 : vector<2x8x64xf32>
    %c0_19 = arith.constant 0 : index
    %c0_20 = arith.constant 0 : index
    %44 = vector.load %arg4[%c0_19, %c0_20] : memref<8x8xbf16, #tpu.memory_space<vmem>>, vector<8x8xbf16>
    %45 = arith.truncf %43 : vector<2x8x64xf32> to vector<2x8x64xbf16>
    %46 = vector.shape_cast %44 : vector<8x8xbf16> to vector<1x8x8xbf16>
    %47 = vector.broadcast %46 : vector<1x8x8xbf16> to vector<2x8x8xbf16>
    %cst_21 = arith.constant dense<0.000000e+00> : vector<2x8x64xf32>
    %48 = tpu.matmul %47, %45, %cst_21 {dimension_numbers = #tpu.dot_dimension_numbers<[2], [1], [1], [2], [0, 0, 0, 1, 1, 2], [0], [0]>} : vector<2x8x8xbf16>, vector<2x8x64xbf16>, vector<2x8x64xf32> -> vector<2x8x64xf32>
    %c0_22 = arith.constant 0 : index
    %c0_23 = arith.constant 0 : index
    %49 = vector.load %arg5[%c0_22, %c0_23] : memref<8x1xf32, #tpu.memory_space<vmem>>, vector<8x1xf32>
    %50 = vector.shape_cast %49 : vector<8x1xf32> to vector<1x8x1xf32>
    %51 = vector.broadcast %50 : vector<1x8x1xf32> to vector<2x8x64xf32>
    %52 = arith.addf %48, %51 : vector<2x8x64xf32>
    %c0_24 = arith.constant 0 : index
    %c0_25 = arith.constant 0 : index
    %53 = vector.load %arg8[%c0_24, %c0_25] : memref<8x1xf32, #tpu.memory_space<vmem>>, vector<8x1xf32>
    %c0_26 = arith.constant 0 : index
    %c0_27 = arith.constant 0 : index
    %54 = vector.load %arg9[%c0_26, %c0_27] : memref<8x1xf32, #tpu.memory_space<vmem>>, vector<8x1xf32>
    %cst_28 = arith.constant dense<0.000000e+00> : vector<2x8xf32>
    %55 = vector.multi_reduction <add>, %52, %cst_28 [2] : vector<2x8x64xf32> to vector<2x8xf32>
    %56 = vector.shape_cast %55 : vector<2x8xf32> to vector<2x8x1xf32>
    %cst_29 = arith.constant dense<0.000000e+00> : vector<8x1xf32>
    %57 = vector.multi_reduction <add>, %56, %cst_29 [0] : vector<2x8x1xf32> to vector<8x1xf32>
    %58 = vector.shape_cast %57 : vector<8x1xf32> to vector<1x8x1xf32>
    %59 = arith.mulf %52, %52 : vector<2x8x64xf32>
    %cst_30 = arith.constant dense<0.000000e+00> : vector<2x8xf32>
    %60 = vector.multi_reduction <add>, %59, %cst_30 [2] : vector<2x8x64xf32> to vector<2x8xf32>
    %61 = vector.shape_cast %60 : vector<2x8xf32> to vector<2x8x1xf32>
    %cst_31 = arith.constant dense<0.000000e+00> : vector<8x1xf32>
    %62 = vector.multi_reduction <add>, %61, %cst_31 [0] : vector<2x8x1xf32> to vector<8x1xf32>
    %63 = vector.shape_cast %62 : vector<8x1xf32> to vector<1x8x1xf32>
    %cst_32 = arith.constant 7.812500e-03 : f32
    %64 = vector.broadcast %cst_32 : f32 to vector<1x8x1xf32>
    %65 = arith.mulf %58, %64 : vector<1x8x1xf32>
    %cst_33 = arith.constant 7.812500e-03 : f32
    %66 = vector.broadcast %cst_33 : f32 to vector<1x8x1xf32>
    %67 = arith.mulf %63, %66 : vector<1x8x1xf32>
    %68 = arith.mulf %65, %65 : vector<1x8x1xf32>
    %69 = arith.subf %67, %68 : vector<1x8x1xf32>
    %cst_34 = arith.constant 0.000000e+00 : f32
    %70 = vector.broadcast %cst_34 : f32 to vector<1x8x1xf32>
    %71 = arith.maximumf %69, %70 : vector<1x8x1xf32>
    %cst_35 = arith.constant 9.99999974E-6 : f32
    %72 = vector.broadcast %cst_35 : f32 to vector<1x8x1xf32>
    %73 = arith.addf %71, %72 : vector<1x8x1xf32>
    %74 = math.rsqrt %73 : vector<1x8x1xf32>
    %75 = vector.shape_cast %53 : vector<8x1xf32> to vector<1x8x1xf32>
    %76 = arith.mulf %74, %75 : vector<1x8x1xf32>
    %77 = vector.broadcast %65 : vector<1x8x1xf32> to vector<2x8x64xf32>
    %78 = arith.subf %52, %77 : vector<2x8x64xf32>
    %79 = vector.broadcast %76 : vector<1x8x1xf32> to vector<2x8x64xf32>
    %80 = arith.mulf %78, %79 : vector<2x8x64xf32>
    %81 = vector.shape_cast %54 : vector<8x1xf32> to vector<1x8x1xf32>
    %82 = vector.broadcast %81 : vector<1x8x1xf32> to vector<2x8x64xf32>
    %83 = arith.addf %80, %82 : vector<2x8x64xf32>
    %c0_36 = arith.constant 0 : index
    %c0_37 = arith.constant 0 : index
    %84 = vector.load %arg10[%c0_36, %c0_37] : memref<8x1xf32, #tpu.memory_space<vmem>>, vector<8x1xf32>
    %c0_38 = arith.constant 0 : index
    %c0_39 = arith.constant 0 : index
    %85 = vector.load %arg11[%c0_38, %c0_39] : memref<8x1xf32, #tpu.memory_space<vmem>>, vector<8x1xf32>
    %cst_40 = arith.constant dense<0.000000e+00> : vector<2x8xf32>
    %86 = vector.multi_reduction <add>, %10, %cst_40 [2] : vector<2x8x64xf32> to vector<2x8xf32>
    %87 = vector.shape_cast %86 : vector<2x8xf32> to vector<2x8x1xf32>
    %cst_41 = arith.constant dense<0.000000e+00> : vector<8x1xf32>
    %88 = vector.multi_reduction <add>, %87, %cst_41 [0] : vector<2x8x1xf32> to vector<8x1xf32>
    %89 = vector.shape_cast %88 : vector<8x1xf32> to vector<1x8x1xf32>
    %90 = arith.mulf %10, %10 : vector<2x8x64xf32>
    %cst_42 = arith.constant dense<0.000000e+00> : vector<2x8xf32>
    %91 = vector.multi_reduction <add>, %90, %cst_42 [2] : vector<2x8x64xf32> to vector<2x8xf32>
    %92 = vector.shape_cast %91 : vector<2x8xf32> to vector<2x8x1xf32>
    %cst_43 = arith.constant dense<0.000000e+00> : vector<8x1xf32>
    %93 = vector.multi_reduction <add>, %92, %cst_43 [0] : vector<2x8x1xf32> to vector<8x1xf32>
    %94 = vector.shape_cast %93 : vector<8x1xf32> to vector<1x8x1xf32>
    %cst_44 = arith.constant 7.812500e-03 : f32
    %95 = vector.broadcast %cst_44 : f32 to vector<1x8x1xf32>
    %96 = arith.mulf %89, %95 : vector<1x8x1xf32>
    %cst_45 = arith.constant 7.812500e-03 : f32
    %97 = vector.broadcast %cst_45 : f32 to vector<1x8x1xf32>
    %98 = arith.mulf %94, %97 : vector<1x8x1xf32>
    %99 = arith.mulf %96, %96 : vector<1x8x1xf32>
    %100 = arith.subf %98, %99 : vector<1x8x1xf32>
    %cst_46 = arith.constant 0.000000e+00 : f32
    %101 = vector.broadcast %cst_46 : f32 to vector<1x8x1xf32>
    %102 = arith.maximumf %100, %101 : vector<1x8x1xf32>
    %cst_47 = arith.constant 9.99999974E-6 : f32
    %103 = vector.broadcast %cst_47 : f32 to vector<1x8x1xf32>
    %104 = arith.addf %102, %103 : vector<1x8x1xf32>
    %105 = math.rsqrt %104 : vector<1x8x1xf32>
    %106 = vector.shape_cast %84 : vector<8x1xf32> to vector<1x8x1xf32>
    %107 = arith.mulf %105, %106 : vector<1x8x1xf32>
    %108 = vector.broadcast %96 : vector<1x8x1xf32> to vector<2x8x64xf32>
    %109 = arith.subf %10, %108 : vector<2x8x64xf32>
    %110 = vector.broadcast %107 : vector<1x8x1xf32> to vector<2x8x64xf32>
    %111 = arith.mulf %109, %110 : vector<2x8x64xf32>
    %112 = vector.shape_cast %85 : vector<8x1xf32> to vector<1x8x1xf32>
    %113 = vector.broadcast %112 : vector<1x8x1xf32> to vector<2x8x64xf32>
    %114 = arith.addf %111, %113 : vector<2x8x64xf32>
    %115 = arith.addf %83, %114 : vector<2x8x64xf32>
    %cst_48 = arith.constant 0.000000e+00 : f32
    %116 = vector.broadcast %cst_48 : f32 to vector<2x8x64xf32>
    %117 = arith.maximumf %115, %116 : vector<2x8x64xf32>
    %c0_49 = arith.constant 0 : index
    %c0_50 = arith.constant 0 : index
    %c0_51 = arith.constant 0 : index
    %118 = vector.load %arg12[%c0_49, %c0_50, %c0_51] : memref<2x8x64xf32, #tpu.memory_space<vmem>>, vector<2x8x64xf32>
    tpu.vector_store %arg12[%c0_49, %c0_50, %c0_51], %117 {strides = array<i32>} : memref<2x8x64xf32, #tpu.memory_space<vmem>>, vector<2x8x64xf32>,
    return
  }
  func.func @transform_0(%arg0: i32) -> (i32, i32, i32) {
    %c0_i32 = arith.constant 0 : i32
    %c0_i32_0 = arith.constant 0 : i32
    %c0_i32_1 = arith.constant 0 : i32
    %c0_i32_2 = arith.constant 0 : i32
    return %c0_i32, %c0_i32_0, %c0_i32_1 : i32, i32, i32
  }
  func.func @transform_1(%arg0: i32) -> (i32, i32) {
    %c0_i32 = arith.constant 0 : i32
    %c0_i32_0 = arith.constant 0 : i32
    %c0_i32_1 = arith.constant 0 : i32
    return %c0_i32, %c0_i32_0 : i32, i32
  }
  func.func @transform_2(%arg0: i32) -> (i32, i32) {
    %c0_i32 = arith.constant 0 : i32
    %c0_i32_0 = arith.constant 0 : i32
    %c0_i32_1 = arith.constant 0 : i32
    return %c0_i32, %c0_i32_0 : i32, i32
  }
  func.func @transform_3(%arg0: i32) -> (i32, i32) {
    %c0_i32 = arith.constant 0 : i32
    %c0_i32_0 = arith.constant 0 : i32
    %c0_i32_1 = arith.constant 0 : i32
    return %c0_i32, %c0_i32_0 : i32, i32
  }
  func.func @transform_4(%arg0: i32) -> (i32, i32) {
    %c0_i32 = arith.constant 0 : i32
    %c0_i32_0 = arith.constant 0 : i32
    %c0_i32_1 = arith.constant 0 : i32
    return %c0_i32, %c0_i32_0 : i32, i32
  }
  func.func @transform_5(%arg0: i32) -> (i32, i32) {
    %c0_i32 = arith.constant 0 : i32
    %c0_i32_0 = arith.constant 0 : i32
    %c0_i32_1 = arith.constant 0 : i32
    return %c0_i32, %c0_i32_0 : i32, i32
  }
  func.func @transform_6(%arg0: i32) -> (i32, i32) {
    %c0_i32 = arith.constant 0 : i32
    %c0_i32_0 = arith.constant 0 : i32
    %c0_i32_1 = arith.constant 0 : i32
    return %c0_i32, %c0_i32_0 : i32, i32
  }
  func.func @transform_7(%arg0: i32) -> (i32, i32) {
    %c0_i32 = arith.constant 0 : i32
    %c0_i32_0 = arith.constant 0 : i32
    %c0_i32_1 = arith.constant 0 : i32
    return %c0_i32, %c0_i32_0 : i32, i32
  }
  func.func @transform_8(%arg0: i32) -> (i32, i32) {
    %c0_i32 = arith.constant 0 : i32
    %c0_i32_0 = arith.constant 0 : i32
    %c0_i32_1 = arith.constant 0 : i32
    return %c0_i32, %c0_i32_0 : i32, i32
  }
  func.func @transform_9(%arg0: i32) -> (i32, i32) {
    %c0_i32 = arith.constant 0 : i32
    %c0_i32_0 = arith.constant 0 : i32
    %c0_i32_1 = arith.constant 0 : i32
    return %c0_i32, %c0_i32_0 : i32, i32
  }
  func.func @transform_10(%arg0: i32) -> (i32, i32) {
    %c0_i32 = arith.constant 0 : i32
    %c0_i32_0 = arith.constant 0 : i32
    %c0_i32_1 = arith.constant 0 : i32
    return %c0_i32, %c0_i32_0 : i32, i32
  }
  func.func @transform_11(%arg0: i32) -> (i32, i32, i32) {
    %c0_i32 = arith.constant 0 : i32
    %c0_i32_0 = arith.constant 0 : i32
    %c0_i32_1 = arith.constant 0 : i32
    %c0_i32_2 = arith.constant 0 : i32
    return %c0_i32, %c0_i32_0, %c0_i32_1 : i32, i32, i32
  }
}

</mosaic_0001>

<llo_original>
// kernel: tpu_custom_call.1
$region0: #{tpu_custom_call.1}
  #allocation0 [shape = 'u32[]', space=smem, size = 0x4, offset = 0x4, fixed_abs, tag = 'smem constant byte address 0x4 - core index']
  #allocation1 [shape = 'u32[144,128]{1,0:T(1,128)}', space=vmem, size = 0x12000, scoped, tag = 'internal scratch']
  %s0 = inlined_call_operand.vmem [shape: bf16[2,4,64], index: 0, kind: input, shape index: {}]
  %s1 = inlined_call_operand.vmem [shape: bf16[16,4], index: 1, kind: input, shape index: {}]
  %s2 = inlined_call_operand.vmem [shape: f32[8,1], index: 2, kind: input, shape index: {}]
  %s3 = inlined_call_operand.vmem [shape: bf16[8,8], index: 3, kind: input, shape index: {}]
  %s4 = inlined_call_operand.vmem [shape: f32[8,1], index: 4, kind: input, shape index: {}]
  %s5 = inlined_call_operand.vmem [shape: f32[8,1], index: 5, kind: input, shape index: {}]
  %s6 = inlined_call_operand.vmem [shape: f32[8,1], index: 6, kind: input, shape index: {}]
  %s7 = inlined_call_operand.vmem [shape: f32[8,1], index: 7, kind: input, shape index: {}]
  %s8 = inlined_call_operand.vmem [shape: f32[8,1], index: 8, kind: input, shape index: {}]
  %s9 = inlined_call_operand.vmem [shape: f32[8,1], index: 9, kind: input, shape index: {}]
  %s10 = inlined_call_operand.vmem [shape: f32[8,1], index: 10, kind: input, shape index: {}]
  %s11 = inlined_call_operand.hbm [shape: f32[2,8,64], index: 11, kind: output, shape index: {}]
  %s12 = sld [smem:[#allocation0]]
  $region54: #{tpu_custom_call.1} parent=0
    _
  %s14 = ssub.s32 1, %s12
  %s15 = scalar_select 0, %s14, %s12
  $region1: #{tpu_custom_call.1} parent=0
    #allocation2 [shape = 'u8[8192]{0}', space=vmem, size = 0x2000, scoped, tag = 'output window, operand 0, single buffered']
    #allocation3 [shape = 's32[1]{0}', space=sflag, size = 0x4, scoped, tag = 'scoped memory for tpu_custom_call.1']
    %16 = vsyncpa [#allocation3], 0
    // Predicated region
    $region2: #{tpu_custom_call.1} parent=1 // pred_check
      _
    $region3: #{tpu_custom_call.1} parent=1 // pred_check_branch
      %18 = sbr.rel (0) target = $region5
    $region4: #{tpu_custom_call.1} parent=1 // pred_region
      _
    $region5: #{tpu_custom_call.1} parent=1 // pred_fallthru
      _
    // Predicated region
    $region6: #{tpu_custom_call.1} parent=1 // pred_check
      _
    $region7: #{tpu_custom_call.1} parent=1 // pred_check_branch
      %20 = sbr.rel (0) target = $region9
    $region8: #{tpu_custom_call.1} parent=1 // pred_region
      _
    $region9: #{tpu_custom_call.1} parent=1 // pred_fallthru
      _
    // Predicated region
    $region10: #{tpu_custom_call.1} parent=1 // pred_check
      _
    $region11: #{tpu_custom_call.1} parent=1 // pred_check_branch
      %22 = sbr.rel (0) target = $region13
    $region12: #{tpu_custom_call.1} parent=1 // pred_region
      _
    $region13: #{tpu_custom_call.1} parent=1 // pred_fallthru
      _
    // Predicated region
    $region14: #{tpu_custom_call.1} parent=1 // pred_check
      _
    $region15: #{tpu_custom_call.1} parent=1 // pred_check_branch
      %24 = sbr.rel (0) target = $region17
    $region16: #{tpu_custom_call.1} parent=1 // pred_region
      _
    $region17: #{tpu_custom_call.1} parent=1 // pred_fallthru
      _
    // Predicated region
    $region18: #{tpu_custom_call.1} parent=1 // pred_check
      _
    $region19: #{tpu_custom_call.1} parent=1 // pred_check_branch
      %26 = sbr.rel (0) target = $region21
    $region20: #{tpu_custom_call.1} parent=1 // pred_region
      _
    $region21: #{tpu_custom_call.1} parent=1 // pred_fallthru
      _
    // Predicated region
    $region22: #{tpu_custom_call.1} parent=1 // pred_check
      _
    $region23: #{tpu_custom_call.1} parent=1 // pred_check_branch
      %28 = sbr.rel (0) target = $region25
    $region24: #{tpu_custom_call.1} parent=1 // pred_region
      _
    $region25: #{tpu_custom_call.1} parent=1 // pred_fallthru
      _
    // Predicated region
    $region26: #{tpu_custom_call.1} parent=1 // pred_check
      _
    $region27: #{tpu_custom_call.1} parent=1 // pred_check_branch
      %30 = sbr.rel (0) target = $region29
    $region28: #{tpu_custom_call.1} parent=1 // pred_region
      _
    $region29: #{tpu_custom_call.1} parent=1 // pred_fallthru
      _
    // Predicated region
    $region30: #{tpu_custom_call.1} parent=1 // pred_check
      _
    $region31: #{tpu_custom_call.1} parent=1 // pred_check_branch
      %32 = sbr.rel (0) target = $region33
    $region32: #{tpu_custom_call.1} parent=1 // pred_region
      _
    $region33: #{tpu_custom_call.1} parent=1 // pred_fallthru
      _
    // Predicated region
    $region34: #{tpu_custom_call.1} parent=1 // pred_check
      _
    $region35: #{tpu_custom_call.1} parent=1 // pred_check_branch
      %34 = sbr.rel (0) target = $region37
    $region36: #{tpu_custom_call.1} parent=1 // pred_region
      _
    $region37: #{tpu_custom_call.1} parent=1 // pred_fallthru
      _
    // Predicated region
    $region38: #{tpu_custom_call.1} parent=1 // pred_check
      _
    $region39: #{tpu_custom_call.1} parent=1 // pred_check_branch
      %36 = sbr.rel (0) target = $region41
    $region40: #{tpu_custom_call.1} parent=1 // pred_region
      _
    $region41: #{tpu_custom_call.1} parent=1 // pred_fallthru
      _
    // Predicated region
    $region42: #{tpu_custom_call.1} parent=1 // pred_check
      _
    $region43: #{tpu_custom_call.1} parent=1 // pred_check_branch
      %38 = sbr.rel (0) target = $region45
    $region44: #{tpu_custom_call.1} parent=1 // pred_region
      _
    $region45: #{tpu_custom_call.1} parent=1 // pred_fallthru
      _
    %v40 = vld [vmem:[%s0] sm:$0x3]
    %v41 = vld [vmem:[%s0 + $0x2] sm:$0x3]
    %v42 = vld [vmem:[%s1] sm:$0xf]
    %v43 = vld [vmem:[%s1 + $0x4] sm:$0xf]
    %v46 = vunpack.c.l.b16 %v42
    %v47 = vunpack.c.l.b16 %v43
    %v48 = vpack.c.b16 %v47, %v46
    %vm49 = vcmask 31744
    %v51 = vsel %vm49, %v48, 0
    %vm53 = vcmask 1041408
    %v55 = vsel %vm53, %v40, 0
    %57 = vmatprep.subr.bf16.mxu0 0
    %58 = vmatpush1.bf16.msra.mxu0 0
    %59 = vmatprep.subr.bf16.mxu0 0
    %60 = vmatpush1.bf16.msra.mxu0 0
    %61 = vmatprep.subr.bf16.mxu0 0
    %62 = vmatpush1.bf16.msra.mxu0 0
    %63 = vmatprep.subr.bf16.mxu0 0
    %64 = vmatpush1.bf16.msra.mxu0 0
    %65 = vmatprep.subr.bf16.mxu0 0
    %66 = vmatpush1.bf16.msra.mxu0 0
    %67 = vmatprep.subr.bf16.mxu0 0
    %68 = vmatpush1.bf16.msra.mxu0 0
    %69 = vmatprep.subr.bf16.mxu0 0
    %70 = vmatpush1.bf16.msra.mxu0 0
    %71 = vmatprep.subr.bf16.mxu0 0
    %72 = vmatpush1.bf16.msra.mxu0 %v55
    %73 = vmatprep.subr.bf16.mxu0 0
    %74 = vmatpush2.bf16.msra.mxu0 0
    %75 = vmatprep.subr.bf16.mxu0 0
    %76 = vmatpush2.bf16.msra.mxu0 0
    %77 = vmatprep.subr.bf16.mxu0 0
    %78 = vmatpush2.bf16.msra.mxu0 0
    %79 = vmatprep.subr.bf16.mxu0 0
    %80 = vmatpush2.bf16.msra.mxu0 0
    %81 = vmatprep.subr.bf16.mxu0 0
    %82 = vmatpush2.bf16.msra.mxu0 0
    %83 = vmatprep.subr.bf16.mxu0 0
    %84 = vmatpush2.bf16.msra.mxu0 0
    %85 = vmatprep.subr.bf16.mxu0 0
    %86 = vmatpush2.bf16.msra.mxu0 0
    %87 = vmatprep.subr.bf16.mxu0 0
    %88 = vmatpush2.bf16.msra.mxu0 0
    %89 = vmatprep.mubr.bf16.mxu0 0
    %90 = vmatmul.mubr.bf16.gmra.mxu0 %v51
    %v91 = vpop.f32.mrf.mxu0
    %v92 = vadd.f32 0.0, %v91
    %v93 = vpop.f32.mrf.mxu0
    %v94 = vpop.f32.mrf.mxu0
    %v95 = vadd.f32 0.0, %v94
    %v96 = vpop.f32.mrf.mxu0
    %97 = vdwg.mxu0
    %v99 = vsel %vm53, %v41, 0
    %101 = vmatprep.subr.bf16.mxu0 0
    %102 = vmatpush1.bf16.msra.mxu0 0
    %103 = vmatprep.subr.bf16.mxu0 0
    %104 = vmatpush1.bf16.msra.mxu0 0
    %105 = vmatprep.subr.bf16.mxu0 0
    %106 = vmatpush1.bf16.msra.mxu0 0
    %107 = vmatprep.subr.bf16.mxu0 0
    %108 = vmatpush1.bf16.msra.mxu0 0
    %109 = vmatprep.subr.bf16.mxu0 0
    %110 = vmatpush1.bf16.msra.mxu0 0
    %111 = vmatprep.subr.bf16.mxu0 0
    %112 = vmatpush1.bf16.msra.mxu0 0
    %113 = vmatprep.subr.bf16.mxu0 0
    %114 = vmatpush1.bf16.msra.mxu0 0
    %115 = vmatprep.subr.bf16.mxu0 0
    %116 = vmatpush1.bf16.msra.mxu0 %v99
    %117 = vmatprep.subr.bf16.mxu0 0
    %118 = vmatpush2.bf16.msra.mxu0 0
    %119 = vmatprep.subr.bf16.mxu0 0
    %120 = vmatpush2.bf16.msra.mxu0 0
    %121 = vmatprep.subr.bf16.mxu0 0
    %122 = vmatpush2.bf16.msra.mxu0 0
    %123 = vmatprep.subr.bf16.mxu0 0
    %124 = vmatpush2.bf16.msra.mxu0 0
    %125 = vmatprep.subr.bf16.mxu0 0
    %126 = vmatpush2.bf16.msra.mxu0 0
    %127 = vmatprep.subr.bf16.mxu0 0
    %128 = vmatpush2.bf16.msra.mxu0 0
    %129 = vmatprep.subr.bf16.mxu0 0
    %130 = vmatpush2.bf16.msra.mxu0 0
    %131 = vmatprep.subr.bf16.mxu0 0
    %132 = vmatpush2.bf16.msra.mxu0 0
    %133 = vmatprep.mubr.bf16.mxu0 0
    %134 = vmatmul.mubr.bf16.gmra.mxu0 %v51
    %v135 = vpop.f32.mrf.mxu0
    %v136 = vadd.f32 0.0, %v135
    %v137 = vpop.f32.mrf.mxu0
    %v138 = vpop.f32.mrf.mxu0
    %v139 = vadd.f32 0.0, %v138
    %v140 = vpop.f32.mrf.mxu0
    %141 = vdwg.mxu0
    %v142 = vld [vmem:[%s2] sm:$0xff]
    %144 = vset.pattern.permute.xlu0 0
    %145 = vperm.xlu0 %144, %v142
    %v146 = vpop.permute.xlu0 %145
    %v148 = vadd.f32 %v92, %v146
    %v149 = vadd.f32 %v136, %v146
    %v150 = vld [vmem:[%s5] sm:$0xff]
    %v151 = vld [vmem:[%s6] sm:$0xff]
    %vm152 = vcmask 523264
    %v153 = vsel %vm152, %v148, 0.0
    %154 = vadd.xlane.f32.xlu0 %v153
    %v155 = vpop.xlane.xlu0 %154
    %v156 = vsel %vm152, %v149, 0.0
    %157 = vadd.xlane.f32.xlu0 %v156
    %v158 = vpop.xlane.xlu0 %157
    %v159 = vadd.f32 %v155, %v158
    %v160 = vmul.f32 %v148, %v148
    %v161 = vmul.f32 %v149, %v149
    %v162 = vsel %vm152, %v160, 0.0
    %163 = vadd.xlane.f32.xlu0 %v162
    %v164 = vpop.xlane.xlu0 %163
    %v165 = vsel %vm152, %v161, 0.0
    %166 = vadd.xlane.f32.xlu0 %v165
    %v167 = vpop.xlane.xlu0 %166
    %v168 = vadd.f32 %v164, %v167
    %v169 = vmul.f32 %v159, 0.0078125
    %v170 = vmul.f32 %v168, 0.0078125
    %v171 = vmul.f32 %v169, %v169
    %v172 = vsub.f32 %v170, %v171
    %v173 = vmax.f32 %v172, 0.0
    %v174 = vadd.f32 %v173, 1e-05
    %v175 = vrsqrt.pop %v174
    %v176 = vmul.f32 %v175, %v150
    %v177 = vsub.f32 %v148, %v169
    %v178 = vsub.f32 %v149, %v169
    %180 = vset.pattern.permute.xlu0 0
    %181 = vperm.xlu0 %180, %v176
    %v182 = vpop.permute.xlu0 %181
    %v184 = vmul.f32 %v177, %v182
    %v185 = vmul.f32 %v178, %v182
    %187 = vset.pattern.permute.xlu0 0
    %188 = vperm.xlu0 %187, %v151
    %v189 = vpop.permute.xlu0 %188
    %v191 = vadd.f32 %v184, %v189
    %v192 = vadd.f32 %v185, %v189
    %v193 = vmax.f32 %v191, 0.0
    %v194 = vmax.f32 %v192, 0.0
    %v195 = vld [vmem:[%s3] sm:$0xf]
    %v196 = vpack.c.bf16 %v193, %v193
    %v197 = vpack.c.bf16 %v194, %v194
    %v198 = vld [vmem:[%s4] sm:$0xff]
    %200 = vset.pattern.permute.xlu0 0
    %201 = vperm.xlu0 %200, %v198
    %v202 = vpop.permute.xlu0 %201
    %vm204 = vcmask 64512
    %v206 = vsel %vm204, %v195, 0
    %vm208 = vcmask 1043456
    %v210 = vsel %vm208, %v196, 0
    %212 = vmatprep.subr.bf16.mxu0 0
    %213 = vmatpush1.bf16.msra.mxu0 0
    %214 = vmatprep.subr.bf16.mxu0 0
    %215 = vmatpush1.bf16.msra.mxu0 0
    %216 = vmatprep.subr.bf16.mxu0 0
    %217 = vmatpush1.bf16.msra.mxu0 0
    %218 = vmatprep.subr.bf16.mxu0 0
    %219 = vmatpush1.bf16.msra.mxu0 0
    %220 = vmatprep.subr.bf16.mxu0 0
    %221 = vmatpush1.bf16.msra.mxu0 0
    %222 = vmatprep.subr.bf16.mxu0 0
    %223 = vmatpush1.bf16.msra.mxu0 0
    %224 = vmatprep.subr.bf16.mxu0 0
    %225 = vmatpush1.bf16.msra.mxu0 0
    %226 = vmatprep.subr.bf16.mxu0 0
    %227 = vmatpush1.bf16.msra.mxu0 %v210
    %228 = vmatprep.subr.bf16.mxu0 0
    %229 = vmatpush2.bf16.msra.mxu0 0
    %230 = vmatprep.subr.bf16.mxu0 0
    %231 = vmatpush2.bf16.msra.mxu0 0
    %232 = vmatprep.subr.bf16.mxu0 0
    %233 = vmatpush2.bf16.msra.mxu0 0
    %234 = vmatprep.subr.bf16.mxu0 0
    %235 = vmatpush2.bf16.msra.mxu0 0
    %236 = vmatprep.subr.bf16.mxu0 0
    %237 = vmatpush2.bf16.msra.mxu0 0
    %238 = vmatprep.subr.bf16.mxu0 0
    %239 = vmatpush2.bf16.msra.mxu0 0
    %240 = vmatprep.subr.bf16.mxu0 0
    %241 = vmatpush2.bf16.msra.mxu0 0
    %242 = vmatprep.subr.bf16.mxu0 0
    %243 = vmatpush2.bf16.msra.mxu0 0
    %244 = vmatprep.mubr.bf16.mxu0 0
    %245 = vmatmul.mubr.bf16.gmra.mxu0 %v206
    %v246 = vpop.f32.mrf.mxu0
    %v247 = vadd.f32 %v202, %v246
    %v248 = vpop.f32.mrf.mxu0
    %v249 = vpop.f32.mrf.mxu0
    %v250 = vpop.f32.mrf.mxu0
    %251 = vdwg.mxu0
    %v253 = vsel %vm208, %v197, 0
    %255 = vmatprep.subr.bf16.mxu0 0
    %256 = vmatpush1.bf16.msra.mxu0 0
    %257 = vmatprep.subr.bf16.mxu0 0
    %258 = vmatpush1.bf16.msra.mxu0 0
    %259 = vmatprep.subr.bf16.mxu0 0
    %260 = vmatpush1.bf16.msra.mxu0 0
    %261 = vmatprep.subr.bf16.mxu0 0
    %262 = vmatpush1.bf16.msra.mxu0 0
    %263 = vmatprep.subr.bf16.mxu0 0
    %264 = vmatpush1.bf16.msra.mxu0 0
    %265 = vmatprep.subr.bf16.mxu0 0
    %266 = vmatpush1.bf16.msra.mxu0 0
    %267 = vmatprep.subr.bf16.mxu0 0
    %268 = vmatpush1.bf16.msra.mxu0 0
    %269 = vmatprep.subr.bf16.mxu0 0
    %270 = vmatpush1.bf16.msra.mxu0 %v253
    %271 = vmatprep.subr.bf16.mxu0 0
    %272 = vmatpush2.bf16.msra.mxu0 0
    %273 = vmatprep.subr.bf16.mxu0 0
    %274 = vmatpush2.bf16.msra.mxu0 0
    %275 = vmatprep.subr.bf16.mxu0 0
    %276 = vmatpush2.bf16.msra.mxu0 0
    %277 = vmatprep.subr.bf16.mxu0 0
    %278 = vmatpush2.bf16.msra.mxu0 0
    %279 = vmatprep.subr.bf16.mxu0 0
    %280 = vmatpush2.bf16.msra.mxu0 0
    %281 = vmatprep.subr.bf16.mxu0 0
    %282 = vmatpush2.bf16.msra.mxu0 0
    %283 = vmatprep.subr.bf16.mxu0 0
    %284 = vmatpush2.bf16.msra.mxu0 0
    %285 = vmatprep.subr.bf16.mxu0 0
    %286 = vmatpush2.bf16.msra.mxu0 0
    %287 = vmatprep.mubr.bf16.mxu0 0
    %288 = vmatmul.mubr.bf16.gmra.mxu0 %v206
    %v289 = vpop.f32.mrf.mxu0
    %v290 = vadd.f32 %v202, %v289
    %v291 = vpop.f32.mrf.mxu0
    %v292 = vpop.f32.mrf.mxu0
    %v293 = vpop.f32.mrf.mxu0
    %294 = vdwg.mxu0
    %v295 = vld [vmem:[%s7] sm:$0xff]
    %v296 = vld [vmem:[%s8] sm:$0xff]
    %v297 = vsel %vm152, %v247, 0.0
    %298 = vadd.xlane.f32.xlu0 %v297
    %v299 = vpop.xlane.xlu0 %298
    %v300 = vsel %vm152, %v290, 0.0
    %301 = vadd.xlane.f32.xlu0 %v300
    %v302 = vpop.xlane.xlu0 %301
    %v303 = vadd.f32 %v299, %v302
    %v304 = vmul.f32 %v247, %v247
    %v305 = vmul.f32 %v290, %v290
    %v306 = vsel %vm152, %v304, 0.0
    %307 = vadd.xlane.f32.xlu0 %v306
    %v308 = vpop.xlane.xlu0 %307
    %v309 = vsel %vm152, %v305, 0.0
    %310 = vadd.xlane.f32.xlu0 %v309
    %v311 = vpop.xlane.xlu0 %310
    %v312 = vadd.f32 %v308, %v311
    %v313 = vmul.f32 %v303, 0.0078125
    %v314 = vmul.f32 %v312, 0.0078125
    %v315 = vmul.f32 %v313, %v313
    %v316 = vsub.f32 %v314, %v315
    %v317 = vmax.f32 %v316, 0.0
    %v318 = vadd.f32 %v317, 1e-05
    %v319 = vrsqrt.pop %v318
    %v320 = vmul.f32 %v319, %v295
    %v321 = vsub.f32 %v247, %v313
    %v322 = vsub.f32 %v290, %v313
    %324 = vset.pattern.permute.xlu0 0
    %325 = vperm.xlu0 %324, %v320
    %v326 = vpop.permute.xlu0 %325
    %v328 = vmul.f32 %v321, %v326
    %v329 = vmul.f32 %v322, %v326
    %331 = vset.pattern.permute.xlu0 0
    %332 = vperm.xlu0 %331, %v296
    %v333 = vpop.permute.xlu0 %332
    %v335 = vadd.f32 %v328, %v333
    %v336 = vadd.f32 %v329, %v333
    %v337 = vld [vmem:[%s9] sm:$0xff]
    %v338 = vld [vmem:[%s10] sm:$0xff]
    %v339 = vsel %vm152, %v95, 0.0
    %340 = vadd.xlane.f32.xlu0 %v339
    %v341 = vpop.xlane.xlu0 %340
    %v342 = vsel %vm152, %v139, 0.0
    %343 = vadd.xlane.f32.xlu0 %v342
    %v344 = vpop.xlane.xlu0 %343
    %v345 = vadd.f32 %v341, %v344
    %v346 = vmul.f32 %v95, %v95
    %v347 = vmul.f32 %v139, %v139
    %v348 = vsel %vm152, %v346, 0.0
    %349 = vadd.xlane.f32.xlu0 %v348
    %v350 = vpop.xlane.xlu0 %349
    %v351 = vsel %vm152, %v347, 0.0
    %352 = vadd.xlane.f32.xlu0 %v351
    %v353 = vpop.xlane.xlu0 %352
    %v354 = vadd.f32 %v350, %v353
    %v355 = vmul.f32 %v345, 0.0078125
    %v356 = vmul.f32 %v354, 0.0078125
    %v357 = vmul.f32 %v355, %v355
    %v358 = vsub.f32 %v356, %v357
    %v359 = vmax.f32 %v358, 0.0
    %v360 = vadd.f32 %v359, 1e-05
    %v361 = vrsqrt.pop %v360
    %v362 = vmul.f32 %v361, %v337
    %v363 = vsub.f32 %v95, %v355
    %v364 = vsub.f32 %v139, %v355
    %366 = vset.pattern.permute.xlu0 0
    %367 = vperm.xlu0 %366, %v362
    %v368 = vpop.permute.xlu0 %367
    %v370 = vmul.f32 %v363, %v368
    %v371 = vmul.f32 %v364, %v368
    %373 = vset.pattern.permute.xlu0 0
    %374 = vperm.xlu0 %373, %v338
    %v375 = vpop.permute.xlu0 %374
    %v377 = vadd.f32 %v370, %v375
    %v378 = vadd.f32 %v371, %v375
    %v379 = vadd.f32 %v335, %v377
    %v380 = vadd.f32 %v336, %v378
    %v381 = vmax.f32 %v379, 0.0
    %v382 = vmax.f32 %v380, 0.0
    %383 = vst.msk [vmem:[#allocation2] sm:$0xff] %vm152, %v381
    %384 = vst.msk [vmem:[#allocation2 + $0x8] sm:$0xff] %vm152, %v382
    // Predicated region
    $region46: #{tpu_custom_call.1} parent=1 // pred_check
      _
    $region47: #{tpu_custom_call.1} parent=1 // pred_check_branch
      %386 = sbr.rel (0) target = $region49
    $region48: #{tpu_custom_call.1} parent=1 // pred_region
      %s388 = ssub.s32 256, 256
      %389 = vsyncadd [#allocation3], %s388
      %s390 = sshll.u32 [#allocation2], 4
      %s391 = int_to_ptr.vmem [resolvable:$true] %s390
      %396 = dma.vmem_to_hbm [thread:$0]  %s391, 256, %s11, [#allocation3], 128, 128, 8
    $region49: #{tpu_custom_call.1} parent=1 // pred_fallthru
      _
    // Predicated region
    $region50: #{tpu_custom_call.1} parent=1 // pred_check
      _
    $region51: #{tpu_custom_call.1} parent=1 // pred_check_branch
      %398 = sbr.rel (0) target = $region53
    $region52: #{tpu_custom_call.1} parent=1 // pred_region
      %399 = dma.done [#allocation3], 256
    $region53: #{tpu_custom_call.1} parent=1 // pred_fallthru
      _
    %400 = vsyncpa [#allocation3], 1

</llo_original>
